<compile_context>
chip_gen: v5e
topology: v5e:2x2
jax: 0.10.0
libtpu: 0.0.40
codegen_flags: <defaults>
</compile_context>

<pallas_src>
import functools

import jax
import jax.numpy as jnp
from jax import lax
from jax.experimental import pallas as pl
from jax.experimental.pallas import tpu as pltpu


def _flash_attn_kernel(xq_ref, xkv_ref, wq_ref, bq_ref, wkv_ref, bkv_ref,
                       o_ref, q_scr, m_scr, l_scr, acc_scr,
                       *, inv_den, tq, tk, a_pad):
    qi = pl.program_id(1)
    ki = pl.program_id(2)
    nk = pl.num_programs(2)

    @pl.when(ki == 0)
    def _init():
        # Q projection once per (batch, q-tile); fold the 1/sqrt(S) scale here.
        q = jnp.dot(xq_ref[...], wq_ref[...],
                    preferred_element_type=jnp.float32)
        q = (q + bq_ref[...].astype(jnp.float32)) * inv_den
        q_scr[...] = q.astype(q_scr.dtype)
        m_scr[...] = jnp.full_like(m_scr, -jnp.inf)
        l_scr[...] = jnp.zeros_like(l_scr)
        acc_scr[...] = jnp.zeros_like(acc_scr)

    # Causal structure: KV blocks entirely above the diagonal contribute
    # nothing — skip their compute entirely.
    @pl.when(ki * tk <= qi * tq + (tq - 1))
    def _compute():
        # Fused K/V projection: one MXU matmul with a 2*A_pad-wide N.
        kv = jnp.dot(xkv_ref[...], wkv_ref[...],
                     preferred_element_type=jnp.float32)
        kv = kv + bkv_ref[...].astype(jnp.float32)
        k = kv[:, :a_pad].astype(xkv_ref.dtype)
        v = kv[:, a_pad:].astype(xkv_ref.dtype)

        # Scores: contract the last dims of q and k (no k.T materialization).
        s = lax.dot_general(q_scr[...], k,
                            dimension_numbers=(((1,), (1,)), ((), ())),
                            preferred_element_type=jnp.float32)

        row = qi * tq + lax.broadcasted_iota(jnp.int32, (tq, tk), 0)
        col = ki * tk + lax.broadcasted_iota(jnp.int32, (tq, tk), 1)
        s = jnp.where(col <= row, s, -jnp.inf)

        # Online softmax update (all statistics in f32).
        m_prev = m_scr[...]
        m_new = jnp.maximum(m_prev, jnp.max(s, axis=-1, keepdims=True))
        alpha = jnp.exp(m_prev - m_new)
        p = jnp.exp(s - m_new)
        l_scr[...] = alpha * l_scr[...] + jnp.sum(p, axis=-1, keepdims=True)
        acc_scr[...] = alpha * acc_scr[...] + jnp.dot(
            p.astype(v.dtype), v, preferred_element_type=jnp.float32)
        m_scr[...] = m_new

    @pl.when(ki == nk - 1)
    def _finalize():
        l = l_scr[...]
        inv_l = pl.reciprocal(l, approx=True)    # EUP slot (vrcp)
        inv_l = inv_l * (2.0 - l * inv_l)        # one Newton step -> ~f32 acc.
        o_ref[...] = (acc_scr[...] * inv_l).astype(o_ref.dtype)


def _pick_tile(size, cap):
    """Largest tile <= cap that divides `size` and is a multiple of 8; fall
    back to the full size (full-extent blocks are always legal)."""
    if size <= cap:
        return size
    for t in range(cap - cap % 8, 7, -8):
        if size % t == 0:
            return t
    return size


def masked_self_attention(x, wk, bk, wq, bq, wv, bv, *, tq_cap=256, tk_cap=512):
    """x: (B, S, E); w*: (E, A); b*: (A,). Returns (B, S, A), matching the
    PyTorch MaskedSelfAttention.forward (scores scaled by sqrt(sequence))."""
    B, S, E = x.shape
    A = wk.shape[1]
    dtype = x.dtype

    # Lane-dense padding of the attention dim. Zero columns are inert for
    # Q.K^T (both operands zero there) and give zero output columns, which are
    # stripped after the call.
    A_pad = ((A + 127) // 128) * 128

    def pad_w(w):
        return jnp.zeros((E, A_pad), dtype).at[:, :A].set(w.astype(dtype))

    def pad_b(b):
        return jnp.zeros((1, A_pad), dtype).at[:, :A].set(b.astype(dtype))

    wq_p = pad_w(wq)
    bq_p = pad_b(bq)
    wkv_p = jnp.concatenate([pad_w(wk), pad_w(wv)], axis=1)   # (E, 2*A_pad)
    bkv_p = jnp.concatenate([pad_b(bk), pad_b(bv)], axis=1)   # (1, 2*A_pad)

    tq = _pick_tile(S, tq_cap)
    tk = _pick_tile(S, tk_cap)
    nq = S // tq
    nk = S // tk

    kernel = functools.partial(
        _flash_attn_kernel,
        inv_den=float(1.0 / (S ** 0.5)),   # module scales by sqrt(sequence)
        tq=tq, tk=tk, a_pad=A_pad)

    def rep_spec(shape):
        return pl.BlockSpec(shape, lambda b, qi, ki: (0, 0))

    out = pl.pallas_call(
        kernel,
        out_shape=jax.ShapeDtypeStruct((B, S, A_pad), dtype),
        grid_spec=pltpu.PrefetchScalarGridSpec(
            num_scalar_prefetch=0,
            grid=(B, nq, nk),
            in_specs=[
                # x viewed as the Q tile and (separately) as the KV tile.
                pl.BlockSpec((pl.Squeezed(), tq, E), lambda b, qi, ki: (b, qi, 0)),
                pl.BlockSpec((pl.Squeezed(), tk, E), lambda b, qi, ki: (b, ki, 0)),
                rep_spec((E, A_pad)),       # Wq (padded)
                rep_spec((1, A_pad)),       # bq (padded)
                rep_spec((E, 2 * A_pad)),   # [Wk | Wv] fused (padded)
                rep_spec((1, 2 * A_pad)),   # [bk | bv] fused (padded)
            ],
            out_specs=pl.BlockSpec((pl.Squeezed(), tq, A_pad),
                                   lambda b, qi, ki: (b, qi, 0)),
            scratch_shapes=[
                pltpu.VMEM((tq, A_pad), dtype),        # scaled Q tile
                pltpu.VMEM((tq, 1), jnp.float32),      # running max m
                pltpu.VMEM((tq, 1), jnp.float32),      # running sum l
                pltpu.VMEM((tq, A_pad), jnp.float32),  # output accumulator
            ],
        ),
        compiler_params=pltpu.CompilerParams(
            dimension_semantics=("parallel", "parallel", "arbitrary"),
            vmem_limit_bytes=64 * 1024 * 1024,
        ),
    )(x, x, wq_p, bq_p, wkv_p, bkv_p)

    return out[..., :A]


def _reference(x, wk, bk, wq, bq, wv, bv):
    """Pure-JAX reference mirroring the PyTorch forward."""
    B, S, E = x.shape
    k = x @ wk + bk
    q = x @ wq + bq
    v = x @ wv + bv
    scores = (q @ jnp.swapaxes(k, -2, -1)) / (S ** 0.5)
    row = jnp.arange(S)[:, None]
    col = jnp.arange(S)[None, :]
    scores = jnp.where(col <= row, scores, -jnp.inf)
    p = jax.nn.softmax(scores, axis=-1)
    return p @ v


if __name__ == "__main__":
    # Small shapes implied by the forward: (batch, seq, input_size)
    B, S, E, A = 2, 8, 32, 16

    key = jax.random.PRNGKey(0)
    kx, kx2, kwk, kbk, kwq, kbq, kwv, kbv = jax.random.split(key, 8)

    x = jax.random.normal(kx, (B, S, E), dtype=jnp.float32)

    # Deterministic nn.Linear-style init: U(-1/sqrt(in), 1/sqrt(in))
    bound = 1.0 / (E ** 0.5)
    init = lambda k, shape: jax.random.uniform(
        k, shape, dtype=jnp.float32, minval=-bound, maxval=bound)
    wk, bk = init(kwk, (E, A)), init(kbk, (A,))
    wq, bq = init(kwq, (E, A)), init(kbq, (A,))
    wv, bv = init(kwv, (E, A)), init(kbv, (A,))

    z = jax.block_until_ready(masked_self_attention(x, wk, bk, wq, bq, wv, bv))
    z_ref = _reference(x, wk, bk, wq, bq, wv, bv)
    assert z.shape == (B, S, A)
    assert jnp.allclose(z, z_ref, atol=1e-3, rtol=1e-3), "mismatch (small shapes)"

    # Also exercise the tiled multi-block path (multiple Q/KV tiles, online
    # softmax across KV blocks, causal block skipping) at a modest size.
    S2 = 256
    x2 = jax.random.normal(kx2, (B, S2, E), dtype=jnp.float32)
    z2 = jax.block_until_ready(
        masked_self_attention(x2, wk, bk, wq, bq, wv, bv, tq_cap=128, tk_cap=128))
    z2_ref = _reference(x2, wk, bk, wq, bq, wv, bv)
    assert z2.shape == (B, S2, A)
    assert jnp.allclose(z2, z2_ref, atol=1e-3, rtol=1e-3), "mismatch (tiled path)"

    print("KERNEL_OK")
</pallas_src>

<mosaic_0001>
module attributes {stable_mosaic.version = 11 : i64} {
  func.func @_flash_attn_kernel(%arg0: i32, %arg1: i32, %arg2: i32, %arg3: memref<1x8x32xf32, #tpu.memory_space<vmem>>, %arg4: memref<1x8x32xf32, #tpu.memory_space<vmem>>, %arg5: memref<32x128xf32, #tpu.memory_space<vmem>>, %arg6: memref<1x128xf32, #tpu.memory_space<vmem>>, %arg7: memref<32x256xf32, #tpu.memory_space<vmem>>, %arg8: memref<1x256xf32, #tpu.memory_space<vmem>>, %arg9: memref<1x8x128xf32, #tpu.memory_space<vmem>>, %arg10: memref<8x128xf32, #tpu.memory_space<vmem>>, %arg11: memref<8x1xf32, #tpu.memory_space<vmem>>, %arg12: memref<8x1xf32, #tpu.memory_space<vmem>>, %arg13: memref<8x128xf32, #tpu.memory_space<vmem>>) attributes {dimension_semantics = [#tpu.dimension_semantics<parallel>, #tpu.dimension_semantics<parallel>, #tpu.dimension_semantics<arbitrary>], iteration_bounds = array<i64: 2, 1, 1>, scalar_prefetch = 0 : i64, scratch_operands = 4 : i64, tpu.core_type = #tpu.core_type<tc>, window_params = [{transform_indices = @transform_0, window_bounds = array<i64: 1, 8, 32>}, {transform_indices = @transform_1, window_bounds = array<i64: 1, 8, 32>}, {pipeline_mode = #tpu.pipeline_mode<synchronous>, transform_indices = @transform_2, window_bounds = array<i64: 32, 128>}, {pipeline_mode = #tpu.pipeline_mode<synchronous>, transform_indices = @transform_3, window_bounds = array<i64: 1, 128>}, {pipeline_mode = #tpu.pipeline_mode<synchronous>, transform_indices = @transform_4, window_bounds = array<i64: 32, 256>}, {pipeline_mode = #tpu.pipeline_mode<synchronous>, transform_indices = @transform_5, window_bounds = array<i64: 1, 256>}, {transform_indices = @transform_6, window_bounds = array<i64: 1, 8, 128>}]} {
    %c0_i32 = arith.constant 0 : i32
    %0 = arith.cmpi eq, %arg2, %c0_i32 : i32
    %1 = arith.extui %0 : i1 to i32
    %c0_i32_0 = arith.constant 0 : i32
    %2 = arith.cmpi ne, %1, %c0_i32_0 : i32
    scf.if %2 {
      %c0 = arith.constant 0 : index
      %c0_5 = arith.constant 0 : index
      %c0_6 = arith.constant 0 : index
      %12 = vector.load %arg3[%c0, %c0_5, %c0_6] : memref<1x8x32xf32, #tpu.memory_space<vmem>>, vector<1x8x32xf32>
      %13 = vector.shape_cast %12 : vector<1x8x32xf32> to vector<8x32xf32>
      %c0_7 = arith.constant 0 : index
      %c0_8 = arith.constant 0 : index
      %14 = vector.load %arg5[%c0_7, %c0_8] : memref<32x128xf32, #tpu.memory_space<vmem>>, vector<32x128xf32>
      %cst = arith.constant dense<0.000000e+00> : vector<8x128xf32>
      %15 = tpu.matmul %13, %14, %cst {dimension_numbers = #tpu.dot_dimension_numbers<[1], [0], [0], [1], [0, 0, 1, 1], [], []>} : vector<8x32xf32>, vector<32x128xf32>, vector<8x128xf32> -> vector<8x128xf32>
      %c0_9 = arith.constant 0 : index
      %c0_10 = arith.constant 0 : index
      %16 = vector.load %arg6[%c0_9, %c0_10] : memref<1x128xf32, #tpu.memory_space<vmem>>, vector<1x128xf32>
      %17 = vector.broadcast %16 : vector<1x128xf32> to vector<8x128xf32>
      %18 = arith.addf %15, %17 : vector<8x128xf32>
      %cst_11 = arith.constant 0.353553385 : f32
      %19 = vector.broadcast %cst_11 : f32 to vector<8x128xf32>
      %20 = arith.mulf %18, %19 : vector<8x128xf32>
      %c0_12 = arith.constant 0 : index
      %c0_13 = arith.constant 0 : index
      %21 = vector.load %arg10[%c0_12, %c0_13] : memref<8x128xf32, #tpu.memory_space<vmem>>, vector<8x128xf32>
      tpu.vector_store %arg10[%c0_12, %c0_13], %20 {strides = array<i32>} : memref<8x128xf32, #tpu.memory_space<vmem>>, vector<8x128xf32>,
      %cst_14 = arith.constant 0xFF800000 : f32
      %22 = vector.broadcast %cst_14 : f32 to vector<8x1xf32>
      %c0_15 = arith.constant 0 : index
      %c0_16 = arith.constant 0 : index
      %23 = vector.load %arg11[%c0_15, %c0_16] : memref<8x1xf32, #tpu.memory_space<vmem>>, vector<8x1xf32>
      tpu.vector_store %arg11[%c0_15, %c0_16], %22 {strides = array<i32>} : memref<8x1xf32, #tpu.memory_space<vmem>>, vector<8x1xf32>,
      %cst_17 = arith.constant 0.000000e+00 : f32
      %24 = vector.broadcast %cst_17 : f32 to vector<8x1xf32>
      %c0_18 = arith.constant 0 : index
      %c0_19 = arith.constant 0 : index
      %25 = vector.load %arg12[%c0_18, %c0_19] : memref<8x1xf32, #tpu.memory_space<vmem>>, vector<8x1xf32>
      tpu.vector_store %arg12[%c0_18, %c0_19], %24 {strides = array<i32>} : memref<8x1xf32, #tpu.memory_space<vmem>>, vector<8x1xf32>,
      %cst_20 = arith.constant 0.000000e+00 : f32
      %26 = vector.broadcast %cst_20 : f32 to vector<8x128xf32>
      %c0_21 = arith.constant 0 : index
      %c0_22 = arith.constant 0 : index
      %27 = vector.load %arg13[%c0_21, %c0_22] : memref<8x128xf32, #tpu.memory_space<vmem>>, vector<8x128xf32>
      tpu.vector_store %arg13[%c0_21, %c0_22], %26 {strides = array<i32>} : memref<8x128xf32, #tpu.memory_space<vmem>>, vector<8x128xf32>,
    } else {
    }
    %c8_i32 = arith.constant 8 : i32
    %3 = arith.muli %arg2, %c8_i32 : i32
    %c8_i32_1 = arith.constant 8 : i32
    %4 = arith.muli %arg1, %c8_i32_1 : i32
    %c7_i32 = arith.constant 7 : i32
    %5 = arith.addi %4, %c7_i32 : i32
    %6 = arith.cmpi sle, %3, %5 : i32
    %7 = arith.extui %6 : i1 to i32
    %c0_i32_2 = arith.constant 0 : i32
    %8 = arith.cmpi ne, %7, %c0_i32_2 : i32
    scf.if %8 {
      %c0 = arith.constant 0 : index
      %c0_5 = arith.constant 0 : index
      %c0_6 = arith.constant 0 : index
      %12 = vector.load %arg4[%c0, %c0_5, %c0_6] : memref<1x8x32xf32, #tpu.memory_space<vmem>>, vector<1x8x32xf32>
      %13 = vector.shape_cast %12 : vector<1x8x32xf32> to vector<8x32xf32>
      %c0_7 = arith.constant 0 : index
      %c0_8 = arith.constant 0 : index
      %14 = vector.load %arg7[%c0_7, %c0_8] : memref<32x256xf32, #tpu.memory_space<vmem>>, vector<32x256xf32>
      %cst = arith.constant dense<0.000000e+00> : vector<8x256xf32>
      %15 = tpu.matmul %13, %14, %cst {dimension_numbers = #tpu.dot_dimension_numbers<[1], [0], [0], [1], [0, 0, 1, 1], [], []>} : vector<8x32xf32>, vector<32x256xf32>, vector<8x256xf32> -> vector<8x256xf32>
      %c0_9 = arith.constant 0 : index
      %c0_10 = arith.constant 0 : index
      %16 = vector.load %arg8[%c0_9, %c0_10] : memref<1x256xf32, #tpu.memory_space<vmem>>, vector<1x256xf32>
      %17 = vector.broadcast %16 : vector<1x256xf32> to vector<8x256xf32>
      %18 = arith.addf %15, %17 : vector<8x256xf32>
      %19 = vector.extract_strided_slice %18 {offsets = [0, 0], sizes = [8, 128], strides = [1, 1]} : vector<8x256xf32> to vector<8x128xf32>
      %20 = vector.extract_strided_slice %18 {offsets = [0, 128], sizes = [8, 128], strides = [1, 1]} : vector<8x256xf32> to vector<8x128xf32>
      %c0_11 = arith.constant 0 : index
      %c0_12 = arith.constant 0 : index
      %21 = vector.load %arg10[%c0_11, %c0_12] : memref<8x128xf32, #tpu.memory_space<vmem>>, vector<8x128xf32>
      %cst_13 = arith.constant dense<0.000000e+00> : vector<8x8xf32>
      %22 = tpu.matmul %21, %19, %cst_13 {dimension_numbers = #tpu.dot_dimension_numbers<[1], [1], [0], [0], [0, 0, 1, 0], [], []>} : vector<8x128xf32>, vector<8x128xf32>, vector<8x8xf32> -> vector<8x8xf32>
      %c8_i32_14 = arith.constant 8 : i32
      %23 = arith.muli %arg1, %c8_i32_14 : i32
      %24 = tpu.iota {dimensions = array<i32: 0>} : vector<8x8xi32>
      %25 = vector.broadcast %23 : i32 to vector<8x8xi32>
      %26 = arith.addi %25, %24 : vector<8x8xi32>
      %c8_i32_15 = arith.constant 8 : i32
      %27 = arith.muli %arg2, %c8_i32_15 : i32
      %28 = tpu.iota {dimensions = array<i32: 1>} : vector<8x8xi32>
      %29 = vector.broadcast %27 : i32 to vector<8x8xi32>
      %30 = arith.addi %29, %28 : vector<8x8xi32>
      %31 = arith.cmpi sle, %30, %26 : vector<8x8xi32>
      %cst_16 = arith.constant 0xFF800000 : f32
      %32 = vector.broadcast %cst_16 : f32 to vector<8x8xf32>
      %33 = arith.select %31, %22, %32 : vector<8x8xi1>, vector<8x8xf32>
      %c0_17 = arith.constant 0 : index
      %c0_18 = arith.constant 0 : index
      %34 = vector.load %arg11[%c0_17, %c0_18] : memref<8x1xf32, #tpu.memory_space<vmem>>, vector<8x1xf32>
      %cst_19 = arith.constant dense<0xFF800000> : vector<8xf32>
      %35 = vector.multi_reduction <maximumf>, %33, %cst_19 [1] : vector<8x8xf32> to vector<8xf32>
      %36 = vector.shape_cast %35 : vector<8xf32> to vector<8x1xf32>
      %37 = arith.maximumf %34, %36 : vector<8x1xf32>
      %38 = arith.subf %34, %37 : vector<8x1xf32>
      %39 = math.exp %38 : vector<8x1xf32>
      %40 = vector.broadcast %37 : vector<8x1xf32> to vector<8x8xf32>
      %41 = arith.subf %33, %40 : vector<8x8xf32>
      %42 = math.exp %41 : vector<8x8xf32>
      %c0_20 = arith.constant 0 : index
      %c0_21 = arith.constant 0 : index
      %43 = vector.load %arg12[%c0_20, %c0_21] : memref<8x1xf32, #tpu.memory_space<vmem>>, vector<8x1xf32>
      %44 = arith.mulf %39, %43 : vector<8x1xf32>
      %cst_22 = arith.constant dense<0.000000e+00> : vector<8xf32>
      %45 = vector.multi_reduction <add>, %42, %cst_22 [1] : vector<8x8xf32> to vector<8xf32>
      %46 = vector.shape_cast %45 : vector<8xf32> to vector<8x1xf32>
      %47 = arith.addf %44, %46 : vector<8x1xf32>
      %c0_23 = arith.constant 0 : index
      %c0_24 = arith.constant 0 : index
      %48 = vector.load %arg12[%c0_23, %c0_24] : memref<8x1xf32, #tpu.memory_space<vmem>>, vector<8x1xf32>
      tpu.vector_store %arg12[%c0_23, %c0_24], %47 {strides = array<i32>} : memref<8x1xf32, #tpu.memory_space<vmem>>, vector<8x1xf32>,
      %c0_25 = arith.constant 0 : index
      %c0_26 = arith.constant 0 : index
      %49 = vector.load %arg13[%c0_25, %c0_26] : memref<8x128xf32, #tpu.memory_space<vmem>>, vector<8x128xf32>
      %50 = vector.broadcast %39 : vector<8x1xf32> to vector<8x128xf32>
      %51 = arith.mulf %50, %49 : vector<8x128xf32>
      %cst_27 = arith.constant dense<0.000000e+00> : vector<8x128xf32>
      %52 = tpu.matmul %42, %20, %cst_27 {dimension_numbers = #tpu.dot_dimension_numbers<[1], [0], [0], [1], [0, 0, 1, 1], [], []>} : vector<8x8xf32>, vector<8x128xf32>, vector<8x128xf32> -> vector<8x128xf32>
      %53 = arith.addf %51, %52 : vector<8x128xf32>
      %c0_28 = arith.constant 0 : index
      %c0_29 = arith.constant 0 : index
      %54 = vector.load %arg13[%c0_28, %c0_29] : memref<8x128xf32, #tpu.memory_space<vmem>>, vector<8x128xf32>
      tpu.vector_store %arg13[%c0_28, %c0_29], %53 {strides = array<i32>} : memref<8x128xf32, #tpu.memory_space<vmem>>, vector<8x128xf32>,
      %c0_30 = arith.constant 0 : index
      %c0_31 = arith.constant 0 : index
      %55 = vector.load %arg11[%c0_30, %c0_31] : memref<8x1xf32, #tpu.memory_space<vmem>>, vector<8x1xf32>
      tpu.vector_store %arg11[%c0_30, %c0_31], %37 {strides = array<i32>} : memref<8x1xf32, #tpu.memory_space<vmem>>, vector<8x1xf32>,
    } else {
    }
    %c0_i32_3 = arith.constant 0 : i32
    %9 = arith.cmpi eq, %arg2, %c0_i32_3 : i32
    %10 = arith.extui %9 : i1 to i32
    %c0_i32_4 = arith.constant 0 : i32
    %11 = arith.cmpi ne, %10, %c0_i32_4 : i32
    scf.if %11 {
      %c0 = arith.constant 0 : index
      %c0_5 = arith.constant 0 : index
      %12 = vector.load %arg12[%c0, %c0_5] : memref<8x1xf32, #tpu.memory_space<vmem>>, vector<8x1xf32>
      %13 = tpu.reciprocal %12 {approx = true} : vector<8x1xf32> -> vector<8x1xf32>
      %14 = arith.mulf %12, %13 : vector<8x1xf32>
      %cst = arith.constant 2.000000e+00 : f32
      %15 = vector.broadcast %cst : f32 to vector<8x1xf32>
      %16 = arith.subf %15, %14 : vector<8x1xf32>
      %17 = arith.mulf %13, %16 : vector<8x1xf32>
      %c0_6 = arith.constant 0 : index
      %c0_7 = arith.constant 0 : index
      %18 = vector.load %arg13[%c0_6, %c0_7] : memref<8x128xf32, #tpu.memory_space<vmem>>, vector<8x128xf32>
      %19 = vector.broadcast %17 : vector<8x1xf32> to vector<8x128xf32>
      %20 = arith.mulf %18, %19 : vector<8x128xf32>
      %c0_8 = arith.constant 0 : index
      %c0_9 = arith.constant 0 : index
      %c0_10 = arith.constant 0 : index
      %21 = vector.load %arg9[%c0_8, %c0_9, %c0_10] : memref<1x8x128xf32, #tpu.memory_space<vmem>>, vector<1x8x128xf32>
      %22 = vector.shape_cast %21 : vector<1x8x128xf32> to vector<8x128xf32>
      %23 = vector.shape_cast %20 : vector<8x128xf32> to vector<1x8x128xf32>
      tpu.vector_store %arg9[%c0_8, %c0_9, %c0_10], %23 {strides = array<i32>} : memref<1x8x128xf32, #tpu.memory_space<vmem>>, vector<1x8x128xf32>,
    } else {
    }
    return
  }
  func.func @transform_0(%arg0: i32, %arg1: i32, %arg2: i32) -> (i32, i32, i32) {
    %c0_i32 = arith.constant 0 : i32
    %c0_i32_0 = arith.constant 0 : i32
    return %arg0, %arg1, %c0_i32 : i32, i32, i32
  }
  func.func @transform_1(%arg0: i32, %arg1: i32, %arg2: i32) -> (i32, i32, i32) {
    %c0_i32 = arith.constant 0 : i32
    %c0_i32_0 = arith.constant 0 : i32
    return %arg0, %arg2, %c0_i32 : i32, i32, i32
  }
  func.func @transform_2(%arg0: i32, %arg1: i32, %arg2: i32) -> (i32, i32) {
    %c0_i32 = arith.constant 0 : i32
    %c0_i32_0 = arith.constant 0 : i32
    %c0_i32_1 = arith.constant 0 : i32
    return %c0_i32, %c0_i32_0 : i32, i32
  }
  func.func @transform_3(%arg0: i32, %arg1: i32, %arg2: i32) -> (i32, i32) {
    %c0_i32 = arith.constant 0 : i32
    %c0_i32_0 = arith.constant 0 : i32
    %c0_i32_1 = arith.constant 0 : i32
    return %c0_i32, %c0_i32_0 : i32, i32
  }
  func.func @transform_4(%arg0: i32, %arg1: i32, %arg2: i32) -> (i32, i32) {
    %c0_i32 = arith.constant 0 : i32
    %c0_i32_0 = arith.constant 0 : i32
    %c0_i32_1 = arith.constant 0 : i32
    return %c0_i32, %c0_i32_0 : i32, i32
  }
  func.func @transform_5(%arg0: i32, %arg1: i32, %arg2: i32) -> (i32, i32) {
    %c0_i32 = arith.constant 0 : i32
    %c0_i32_0 = arith.constant 0 : i32
    %c0_i32_1 = arith.constant 0 : i32
    return %c0_i32, %c0_i32_0 : i32, i32
  }
  func.func @transform_6(%arg0: i32, %arg1: i32, %arg2: i32) -> (i32, i32, i32) {
    %c0_i32 = arith.constant 0 : i32
    %c0_i32_0 = arith.constant 0 : i32
    return %arg0, %arg1, %c0_i32 : i32, i32, i32
  }
}

</mosaic_0001>

<llo_original>
// kernel: tpu_custom_call.1
$region0: #{tpu_custom_call.1}
  #allocation0 [shape = 'u32[]', space=smem, size = 0x4, offset = 0x4, fixed_abs, tag = 'smem constant byte address 0x4 - core index']
  #allocation1 [shape = 'u32[72,128]{1,0:T(1,128)}', space=vmem, size = 0x9000, scoped, tag = 'internal scratch']
  #allocation2 [shape = 'f32[8,128]{1,0:T(8,128)}', space=vmem, size = 0x1000, scoped, tag = 'scratch operand']
  #allocation3 [shape = 'f32[8,1]{1,0:T(8,128)}', space=vmem, size = 0x1000, scoped, tag = 'scratch operand']
  #allocation4 [shape = 'f32[8,1]{1,0:T(8,128)}', space=vmem, size = 0x1000, scoped, tag = 'scratch operand']
  #allocation5 [shape = 'f32[8,128]{1,0:T(8,128)}', space=vmem, size = 0x1000, scoped, tag = 'scratch operand']
  %s0 = inlined_call_operand.hbm [shape: f32[2,8,32], index: 0, kind: input, shape index: {}]
  %s1 = inlined_call_operand.hbm [shape: f32[2,8,32], index: 1, kind: input, shape index: {}]
  %s2 = inlined_call_operand.hbm [shape: f32[32,128], index: 2, kind: input, shape index: {}]
  %s3 = inlined_call_operand.vmem [shape: f32[1,128], index: 3, kind: input, shape index: {}]
  %s4 = inlined_call_operand.hbm [shape: f32[32,256], index: 4, kind: input, shape index: {}]
  %s5 = inlined_call_operand.vmem [shape: f32[1,256], index: 5, kind: input, shape index: {}]
  %s6 = inlined_call_operand.hbm [shape: f32[2,8,128], index: 6, kind: output, shape index: {}]
  %s7 = sld [smem:[#allocation0]]
  $region85: #{tpu_custom_call.1} parent=0
    _
  %s9 = ssub.s32 1, %s7
  %s10 = scalar_select 0, %s9, %s7
  $region1: #{tpu_custom_call.1} parent=0
    #allocation6 [shape = 'u8[8192]{0}', space=vmem, size = 0x2000, scoped, tag = 'input window, operand 0']
    #allocation7 [shape = 's32[2]{0}', space=sflag, size = 0x8, scoped, tag = 'scoped memory for tpu_custom_call.1']
    #allocation8 [shape = 's32[2]{0}', space=sflag, size = 0x8, scoped, tag = 'scoped memory for tpu_custom_call.1']
    #allocation9 [shape = 'u8[8192]{0}', space=vmem, size = 0x2000, scoped, tag = 'input window, operand 1']
    #allocation10 [shape = 's32[2]{0}', space=sflag, size = 0x8, scoped, tag = 'scoped memory for tpu_custom_call.1']
    #allocation11 [shape = 'u8[16384]{0}', space=vmem, size = 0x4000, scoped, tag = 'input window, operand 2, single buffered']
    #allocation12 [shape = 'u8[32768]{0}', space=vmem, size = 0x8000, scoped, tag = 'input window, operand 4, single buffered']
    #allocation13 [shape = 's32[1]{0}', space=sflag, size = 0x4, scoped, tag = 'scoped memory for tpu_custom_call.1']
    #allocation14 [shape = 'u8[8192]{0}', space=vmem, size = 0x2000, scoped, tag = 'output window, operand 0']
    %11 = vsyncpa [#allocation7], 0
    %s12 = scalar_lea.sflag [#allocation7], 1
    %13 = vsyncpa %s12, 0
    %14 = vsyncpa [#allocation10], 0
    %s15 = scalar_lea.sflag [#allocation10], 1
    %16 = vsyncpa %s15, 0
    %17 = vsyncpa [#allocation13], 0
    %18 = vsyncpa [#allocation8], 0
    %s19 = scalar_lea.sflag [#allocation8], 1
    %20 = vsyncpa %s19, 0
    loop: start=0, step=1, limit=4
    $region2: #{tpu_custom_call.1} parent=1 // loop_pre_header
      _
    $region3: #{tpu_custom_call.1} parent=1 // loop_header
      %s22 = sphi 0, %s26
      %p23 = scmp.ge.s32.totalorder %s22, 4
      %s29 = sphi 0, %s48
      %s30 = sphi 0, %s44
      %s31 = sphi 0, %s40
      %s32 = sphi 0, %s29
      %s33 = sphi 0, %s30
      %s34 = sphi 0, %s31
      %s35 = sphi 0, %s32
      %s36 = sphi 0, %s33
      %s37 = sphi 0, %s34
      %s53 = sphi 0, %s55
      %s56 = sphi 0, %s53
      %s57 = sphi 0, %s56
      %s73 = sphi 0, %s57
      %s81 = sphi 0, %s83
      %s84 = sphi 0, %s81
      %s85 = sphi 0, %s84
      %s101 = sphi 0, %s85
      %s105 = sphi 0, %s105
      %s107 = sphi 0, %s105
      %s108 = sphi 0, %s107
      %s122 = sphi 0, %s108
      %s126 = sphi 0, %s126
      %s128 = sphi 0, %s126
      %s129 = sphi 0, %s128
      %s143 = sphi 0, %s129
      %s147 = sphi 0, %s147
      %s149 = sphi 0, %s147
      %s150 = sphi 0, %s149
      %s164 = sphi 0, %s150
      %s168 = sphi 0, %s168
      %s170 = sphi 0, %s168
      %s171 = sphi 0, %s170
      %s185 = sphi 0, %s171
      %s193 = sphi 0, %s195
      %s196 = sphi 0, %s193
      %s197 = sphi 0, %s196
      %s213 = sphi 0, %s197
    $region4: #{tpu_custom_call.1} parent=1 // loop_header_branch
      %25 = sbr.rel (%p23) target = $region8
    $region5: #{tpu_custom_call.1} parent=1 // loop_body
      %s27 = ssub.s32 %s22, 1
      %s28 = ssub.s32 %s22, 2
      %s38 = sadd.s32 1, %s31
      %p39 = scmp.ge.s32.totalorder %s38, 1
      %s40 = scalar_select %p39, 0, %s38
      %s41 = sadd.s32 1, %s30
      %s42 = scalar_select %p39, %s41, %s30
      %p43 = scmp.ge.s32.totalorder %s42, 1
      %s44 = scalar_select %p43, 0, %s42
      %s45 = sadd.s32 1, %s29
      %s46 = scalar_select %p43, %s45, %s29
      %p47 = scmp.ge.s32.totalorder %s46, 2
      %s48 = scalar_select %p47, 0, %s46
      %s49 = ssub.s32 %s29, %s48
      %s50 = ssub.s32 %s30, %s44
      %s51 = sor.u32 %s49, %s50
      %p52 = scmp.eq.s32.totalorder %s51, 0
      %s54 = sadd.s32 %s53, 1
      %s55 = scalar_select %p52, %s53, %s54
      %p58 = pneg %p52
      %p59 = scmp.eq.s32.totalorder %s22, 1
      %p60 = por %p58, %p59
      %p61 = scmp.ne.s32.totalorder %s53, %s56
      %p62 = scmp.eq.s32.totalorder %s22, 0
      %p63 = por %p61, %p62
      %p64 = scmp.ne.s32.totalorder %s53, %s56
      %p65 = scmp.eq.s32.totalorder %s27, 1
      %p66 = por %p64, %p65
      %p67 = scmp.ne.s32.totalorder %s56, %s57
      %p68 = scmp.eq.s32.totalorder %s27, 0
      %p69 = por %p67, %p68
      %p70 = scmp.ne.s32.totalorder %s56, %s57
      %p71 = scmp.eq.s32.totalorder %s28, 1
      %p72 = por %p70, %p71
      %p74 = scmp.ne.s32.totalorder %s57, %s73
      %p75 = scmp.eq.s32.totalorder %s28, 0
      %p76 = por %p74, %p75
      %s77 = ssub.s32 %s29, %s48
      %s78 = ssub.s32 %s31, %s40
      %s79 = sor.u32 %s77, %s78
      %p80 = scmp.eq.s32.totalorder %s79, 0
      %s82 = sadd.s32 %s81, 1
      %s83 = scalar_select %p80, %s81, %s82
      %p86 = pneg %p80
      %p87 = scmp.eq.s32.totalorder %s22, 1
      %p88 = por %p86, %p87
      %p89 = scmp.ne.s32.totalorder %s81, %s84
      %p90 = scmp.eq.s32.totalorder %s22, 0
      %p91 = por %p89, %p90
      %p92 = scmp.ne.s32.totalorder %s81, %s84
      %p93 = scmp.eq.s32.totalorder %s27, 1
      %p94 = por %p92, %p93
      %p95 = scmp.ne.s32.totalorder %s84, %s85
      %p96 = scmp.eq.s32.totalorder %s27, 0
      %p97 = por %p95, %p96
      %p98 = scmp.ne.s32.totalorder %s84, %s85
      %p99 = scmp.eq.s32.totalorder %s28, 1
      %p100 = por %p98, %p99
      %p102 = scmp.ne.s32.totalorder %s85, %s101
      %p103 = scmp.eq.s32.totalorder %s28, 0
      %p104 = por %p102, %p103
      %s106 = sadd.s32 %s105, 1
      %p109 = scmp.eq.s32.totalorder %s22, 1
      %p110 = scmp.ne.s32.totalorder %s105, %s107
      %p111 = scmp.eq.s32.totalorder %s22, 0
      %p112 = por %p110, %p111
      %p113 = scmp.ne.s32.totalorder %s105, %s107
      %p114 = scmp.eq.s32.totalorder %s27, 1
      %p115 = por %p113, %p114
      %p116 = scmp.ne.s32.totalorder %s107, %s108
      %p117 = scmp.eq.s32.totalorder %s27, 0
      %p118 = por %p116, %p117
      %p119 = scmp.ne.s32.totalorder %s107, %s108
      %p120 = scmp.eq.s32.totalorder %s28, 1
      %p121 = por %p119, %p120
      %p123 = scmp.ne.s32.totalorder %s108, %s122
      %p124 = scmp.eq.s32.totalorder %s28, 0
      %p125 = por %p123, %p124
      %s127 = sadd.s32 %s126, 1
      %p130 = scmp.eq.s32.totalorder %s22, 1
      %p131 = scmp.ne.s32.totalorder %s126, %s128
      %p132 = scmp.eq.s32.totalorder %s22, 0
      %p133 = por %p131, %p132
      %p134 = scmp.ne.s32.totalorder %s126, %s128
      %p135 = scmp.eq.s32.totalorder %s27, 1
      %p136 = por %p134, %p135
      %p137 = scmp.ne.s32.totalorder %s128, %s129
      %p138 = scmp.eq.s32.totalorder %s27, 0
      %p139 = por %p137, %p138
      %p140 = scmp.ne.s32.totalorder %s128, %s129
      %p141 = scmp.eq.s32.totalorder %s28, 1
      %p142 = por %p140, %p141
      %p144 = scmp.ne.s32.totalorder %s129, %s143
      %p145 = scmp.eq.s32.totalorder %s28, 0
      %p146 = por %p144, %p145
      %s148 = sadd.s32 %s147, 1
      %p151 = scmp.eq.s32.totalorder %s22, 1
      %p152 = scmp.ne.s32.totalorder %s147, %s149
      %p153 = scmp.eq.s32.totalorder %s22, 0
      %p154 = por %p152, %p153
      %p155 = scmp.ne.s32.totalorder %s147, %s149
      %p156 = scmp.eq.s32.totalorder %s27, 1
      %p157 = por %p155, %p156
      %p158 = scmp.ne.s32.totalorder %s149, %s150
      %p159 = scmp.eq.s32.totalorder %s27, 0
      %p160 = por %p158, %p159
      %p161 = scmp.ne.s32.totalorder %s149, %s150
      %p162 = scmp.eq.s32.totalorder %s28, 1
      %p163 = por %p161, %p162
      %p165 = scmp.ne.s32.totalorder %s150, %s164
      %p166 = scmp.eq.s32.totalorder %s28, 0
      %p167 = por %p165, %p166
      %s169 = sadd.s32 %s168, 1
      %p172 = scmp.eq.s32.totalorder %s22, 1
      %p173 = scmp.ne.s32.totalorder %s168, %s170
      %p174 = scmp.eq.s32.totalorder %s22, 0
      %p175 = por %p173, %p174
      %p176 = scmp.ne.s32.totalorder %s168, %s170
      %p177 = scmp.eq.s32.totalorder %s27, 1
      %p178 = por %p176, %p177
      %p179 = scmp.ne.s32.totalorder %s170, %s171
      %p180 = scmp.eq.s32.totalorder %s27, 0
      %p181 = por %p179, %p180
      %p182 = scmp.ne.s32.totalorder %s170, %s171
      %p183 = scmp.eq.s32.totalorder %s28, 1
      %p184 = por %p182, %p183
      %p186 = scmp.ne.s32.totalorder %s171, %s185
      %p187 = scmp.eq.s32.totalorder %s28, 0
      %p188 = por %p186, %p187
      %s189 = ssub.s32 %s29, %s48
      %s190 = ssub.s32 %s30, %s44
      %s191 = sor.u32 %s189, %s190
      %p192 = scmp.eq.s32.totalorder %s191, 0
      %s194 = sadd.s32 %s193, 1
      %s195 = scalar_select %p192, %s193, %s194
      %p198 = pneg %p192
      %p199 = scmp.eq.s32.totalorder %s22, 1
      %p200 = por %p198, %p199
      %p201 = scmp.ne.s32.totalorder %s193, %s196
      %p202 = scmp.eq.s32.totalorder %s22, 0
      %p203 = por %p201, %p202
      %p204 = scmp.ne.s32.totalorder %s193, %s196
      %p205 = scmp.eq.s32.totalorder %s27, 1
      %p206 = por %p204, %p205
      %p207 = scmp.ne.s32.totalorder %s196, %s197
      %p208 = scmp.eq.s32.totalorder %s27, 0
      %p209 = por %p207, %p208
      %p210 = scmp.ne.s32.totalorder %s196, %s197
      %p211 = scmp.eq.s32.totalorder %s28, 1
      %p212 = por %p210, %p211
      %p214 = scmp.ne.s32.totalorder %s197, %s213
      %p215 = scmp.eq.s32.totalorder %s28, 0
      %p216 = por %p214, %p215
      %p217 = scmp.le.s32.totalorder 1, %s22
      %p218 = scmp.lt.s32.totalorder %s22, 3
      %p219 = pnand %p217, %p218
      %p220 = pneg %p219
      // Predicated region
      $region9: #{tpu_custom_call.1} parent=5 // pred_check
        _
      $region10: #{tpu_custom_call.1} parent=5 // pred_check_branch
        %222 = sbr.rel (%p219) target = $region12
      $region11: #{tpu_custom_call.1} parent=5 // pred_region
        %s223 = ssub.s32 %s22, 1
        // Predicated region
        $region13: #{tpu_custom_call.1} parent=11 // pred_check
          %p224 = pneg %p118
        $region14: #{tpu_custom_call.1} parent=11 // pred_check_branch
          %226 = sbr.rel (%p224) target = $region16
        $region15: #{tpu_custom_call.1} parent=11 // pred_region
          %228 = vsyncadd [#allocation10], 0
          %s229 = sshll.u32 %s2, 4
          %s230 = int_to_ptr.hbm [resolvable:$true] %s229
          %s231 = sshll.u32 [#allocation11], 4
          %s232 = int_to_ptr.vmem [resolvable:$true] %s231
          %237 = dma.hbm_to_vmem [thread:$0]  %s230, 512, %s232, [#allocation10], 128, 128, 8
        $region16: #{tpu_custom_call.1} parent=11 // pred_fallthru
          _
        // Predicated region
        $region17: #{tpu_custom_call.1} parent=11 // pred_check
          %p238 = pneg %p139
        $region18: #{tpu_custom_call.1} parent=11 // pred_check_branch
          %240 = sbr.rel (%p238) target = $region20
        $region19: #{tpu_custom_call.1} parent=11 // pred_region
          _
        $region20: #{tpu_custom_call.1} parent=11 // pred_fallthru
          _
        // Predicated region
        $region21: #{tpu_custom_call.1} parent=11 // pred_check
          %p241 = pneg %p160
        $region22: #{tpu_custom_call.1} parent=11 // pred_check_branch
          %243 = sbr.rel (%p241) target = $region24
        $region23: #{tpu_custom_call.1} parent=11 // pred_region
          %245 = vsyncadd [#allocation13], 0
          %s246 = sshll.u32 %s4, 4
          %s247 = int_to_ptr.hbm [resolvable:$true] %s246
          %s248 = sshll.u32 [#allocation12], 4
          %s249 = int_to_ptr.vmem [resolvable:$true] %s248
          %254 = dma.hbm_to_vmem [thread:$0]  %s247, 1024, %s249, [#allocation13], 256, 256, 16
        $region24: #{tpu_custom_call.1} parent=11 // pred_fallthru
          _
        // Predicated region
        $region25: #{tpu_custom_call.1} parent=11 // pred_check
          %p255 = pneg %p181
        $region26: #{tpu_custom_call.1} parent=11 // pred_check_branch
          %257 = sbr.rel (%p255) target = $region28
        $region27: #{tpu_custom_call.1} parent=11 // pred_region
          _
        $region28: #{tpu_custom_call.1} parent=11 // pred_fallthru
          _
      $region12: #{tpu_custom_call.1} parent=5 // pred_fallthru
        _
      %p258 = scmp.lt.s32.totalorder %s22, 2
      // Predicated region
      $region29: #{tpu_custom_call.1} parent=5 // pred_check
        %p259 = pneg %p258
      $region30: #{tpu_custom_call.1} parent=5 // pred_check_branch
        %261 = sbr.rel (%p259) target = $region32
      $region31: #{tpu_custom_call.1} parent=5 // pred_region
        // Predicated region
        $region33: #{tpu_custom_call.1} parent=31 // pred_check
          %p262 = pneg %p63
        $region34: #{tpu_custom_call.1} parent=31 // pred_check_branch
          %264 = sbr.rel (%p262) target = $region36
        $region35: #{tpu_custom_call.1} parent=31 // pred_region
          %s265 = sand.u32 %s53, 1
          %s266 = scalar_lea.sflag [#allocation7], %s265
          %s267 = sand.u32 %s53, 1
          %s268 = smul.addr %s267, 8
          %s269 = scalar_lea.vmem [#allocation6], %s268
          %271 = vsyncadd %s266, 0
          %s272 = sadd.s32 %s30, %s29
          %s273 = smul.addr %s272, 8
          %s274 = scalar_lea.hbm %s0, %s273
          %s276 = sshll.u32 %s274, 4
          %s277 = int_to_ptr.hbm [resolvable:$true] %s276
          %s278 = sshll.u32 %s269, 4
          %s279 = int_to_ptr.vmem [resolvable:$true] %s278
          %281 = dma.hbm_to_vmem [thread:$0]  %s277, 128, %s279, %s266
        $region36: #{tpu_custom_call.1} parent=31 // pred_fallthru
          _
        // Predicated region
        $region37: #{tpu_custom_call.1} parent=31 // pred_check
          %p282 = pneg %p91
        $region38: #{tpu_custom_call.1} parent=31 // pred_check_branch
          %284 = sbr.rel (%p282) target = $region40
        $region39: #{tpu_custom_call.1} parent=31 // pred_region
          %s285 = sand.u32 %s22, 1
          %s286 = scalar_lea.sflag [#allocation10], %s285
          %s287 = sand.u32 %s81, 1
          %s288 = smul.addr %s287, 8
          %s289 = scalar_lea.vmem [#allocation9], %s288
          %291 = vsyncadd %s286, 0
          %s292 = sadd.s32 %s31, %s29
          %s293 = smul.addr %s292, 8
          %s294 = scalar_lea.hbm %s1, %s293
          %s296 = sshll.u32 %s294, 4
          %s297 = int_to_ptr.hbm [resolvable:$true] %s296
          %s298 = sshll.u32 %s289, 4
          %s299 = int_to_ptr.vmem [resolvable:$true] %s298
          %301 = dma.hbm_to_vmem [thread:$0]  %s297, 128, %s299, %s286
        $region40: #{tpu_custom_call.1} parent=31 // pred_fallthru
          _
      $region32: #{tpu_custom_call.1} parent=5 // pred_fallthru
        _
      %p302 = scmp.le.s32.totalorder 1, %s22
      %p303 = scmp.lt.s32.totalorder %s22, 3
      %p304 = pnand %p302, %p303
      %p305 = pneg %p304
      // Predicated region
      $region41: #{tpu_custom_call.1} parent=5 // pred_check
        _
      $region42: #{tpu_custom_call.1} parent=5 // pred_check_branch
        %307 = sbr.rel (%p304) target = $region44
      $region43: #{tpu_custom_call.1} parent=5 // pred_region
        %s308 = ssub.s32 %s22, 1
        %s309 = sand.u32 %s56, 1
        %s310 = scalar_lea.sflag [#allocation7], %s309
        %s311 = sand.u32 %s56, 1
        %s312 = smul.addr %s311, 8
        %s313 = scalar_lea.vmem [#allocation6], %s312
        // Predicated region
        $region45: #{tpu_custom_call.1} parent=43 // pred_check
          %p314 = pneg %p69
        $region46: #{tpu_custom_call.1} parent=43 // pred_check_branch
          %316 = sbr.rel (%p314) target = $region48
        $region47: #{tpu_custom_call.1} parent=43 // pred_region
          %318 = dma.done %s310, 128
        $region48: #{tpu_custom_call.1} parent=43 // pred_fallthru
          _
        %s319 = sand.u32 %s27, 1
        %s320 = scalar_lea.sflag [#allocation10], %s319
        %s321 = sand.u32 %s84, 1
        %s322 = smul.addr %s321, 8
        %s323 = scalar_lea.vmem [#allocation9], %s322
        // Predicated region
        $region49: #{tpu_custom_call.1} parent=43 // pred_check
          %p324 = pneg %p97
        $region50: #{tpu_custom_call.1} parent=43 // pred_check_branch
          %326 = sbr.rel (%p324) target = $region52
        $region51: #{tpu_custom_call.1} parent=43 // pred_region
          %328 = dma.done %s320, 128
        $region52: #{tpu_custom_call.1} parent=43 // pred_fallthru
          _
        // Predicated region
        $region53: #{tpu_custom_call.1} parent=43 // pred_check
          %p329 = pneg %p118
        $region54: #{tpu_custom_call.1} parent=43 // pred_check_branch
          %331 = sbr.rel (%p329) target = $region56
        $region55: #{tpu_custom_call.1} parent=43 // pred_region
          %333 = dma.done [#allocation10], 512
        $region56: #{tpu_custom_call.1} parent=43 // pred_fallthru
          _
        // Predicated region
        $region57: #{tpu_custom_call.1} parent=43 // pred_check
          %p334 = pneg %p160
        $region58: #{tpu_custom_call.1} parent=43 // pred_check_branch
          %336 = sbr.rel (%p334) target = $region60
        $region59: #{tpu_custom_call.1} parent=43 // pred_region
          %338 = dma.done [#allocation13], 1024
        $region60: #{tpu_custom_call.1} parent=43 // pred_fallthru
          _
        %s339 = sand.u32 %s56, 1
        %s340 = scalar_lea.sflag [#allocation7], %s339
        %s341 = sand.u32 %s56, 1
        %s342 = smul.addr %s341, 8
        %s343 = scalar_lea.vmem [#allocation6], %s342
        %p344 = pneg %p69
        %p345 = pneg %p66
        %s346 = sand.u32 %s27, 1
        %s347 = scalar_lea.sflag [#allocation10], %s346
        %s348 = sand.u32 %s84, 1
        %s349 = smul.addr %s348, 8
        %s350 = scalar_lea.vmem [#allocation9], %s349
        %p351 = pneg %p97
        %p352 = pneg %p94
        %p353 = pneg %p118
        %p354 = pneg %p115
        %p355 = pneg %p139
        %p356 = pneg %p136
        %p357 = pneg %p160
        %p358 = pneg %p157
        %p359 = pneg %p181
        %p360 = pneg %p178
        %p361 = pneg %p209
        %p362 = pneg %p206
        %s363 = sand.u32 %s196, 1
        %s364 = scalar_lea.sflag [#allocation8], %s363
        %s365 = sand.u32 %s196, 1
        %s366 = smul.addr %s365, 8
        %s367 = scalar_lea.vmem [#allocation14], %s366
        %p368 = scmp.eq.s32.totalorder %s34, 0
        // Predicated region
        $region61: #{tpu_custom_call.1} parent=43 // pred_check
          %p369 = pneg %p368
        $region62: #{tpu_custom_call.1} parent=43 // pred_check_branch
          %371 = sbr.rel (%p369) target = $region64
        $region63: #{tpu_custom_call.1} parent=43 // pred_region
          %v372 = vld [vmem:[%s313] sm:$0xff]
          %v373 = vld [vmem:[#allocation11] sm:$0xff]
          %v374 = vld [vmem:[#allocation11 + $0x8] sm:$0xff]
          %v375 = vld [vmem:[#allocation11 + $0x10] sm:$0xff]
          %v376 = vld [vmem:[#allocation11 + $0x18] sm:$0xff]
          %v377 = vld [vmem:[%s3] sm:$0x1]
          %v379 = vperm.slane %v377, 0
          %vm381 = vcmask 261120
          %v383 = vsel %vm381, %v372, 0
          %385 = vmatpush.msra.mxu0 0.0
          %386 = vmatpush.msra.mxu0 0.0
          %387 = vmatpush.msra.mxu0 0.0
          %388 = vmatpush.msra.mxu0 0.0
          %389 = vmatpush.msra.mxu0 0.0
          %390 = vmatpush.msra.mxu0 0.0
          %391 = vmatpush.msra.mxu0 0.0
          %392 = vmatpush.msra.mxu0 0.0
          %393 = vmatpush.msra.mxu0 0.0
          %394 = vmatpush.msra.mxu0 0.0
          %395 = vmatpush.msra.mxu0 0.0
          %396 = vmatpush.msra.mxu0 0.0
          %397 = vmatpush.msra.mxu0 %v376
          %398 = vmatpush.msra.mxu0 %v375
          %399 = vmatpush.msra.mxu0 %v374
          %400 = vmatpush.msra.mxu0 %v373
          %401 = vmatmul.f32.gmra.mxu0 %v383
          %v402 = vpop.f32.mrf.mxu0
          %v403 = vadd.f32 %v379, %v402
          %404 = vdwg.mxu0
          %v405 = vmul.f32 %v403, 0.35355338
          %406 = vst [vmem:[#allocation2] sm:$0xff] %v405
          %vm407 = vcmask 7168
          %408 = vst.msk [vmem:[#allocation3] sm:$0xff] %vm407, -inf
          %409 = vst.msk [vmem:[#allocation4] sm:$0xff] %vm407, 0.0
          %410 = vst [vmem:[#allocation5] sm:$0xff] 0.0
        $region64: #{tpu_custom_call.1} parent=43 // pred_fallthru
          _
        %s411 = smul.u32 %s34, 8
        %s412 = smul.u32 %s33, 8
        %s413 = sadd.s32 %s412, 7
        %p414 = scmp.le.s32.totalorder %s411, %s413
        // Predicated region
        $region65: #{tpu_custom_call.1} parent=43 // pred_check
          %p415 = pneg %p414
        $region66: #{tpu_custom_call.1} parent=43 // pred_check_branch
          %417 = sbr.rel (%p415) target = $region68
        $region67: #{tpu_custom_call.1} parent=43 // pred_region
          %v418 = vld [vmem:[%s323] sm:$0xff]
          %v419 = vld [vmem:[#allocation12] sm:$0xff]
          %v420 = vld [vmem:[#allocation12 + $0x8] sm:$0xff]
          %v421 = vld [vmem:[#allocation12 + $0x10] sm:$0xff]
          %v422 = vld [vmem:[#allocation12 + $0x18] sm:$0xff]
          %v423 = vld [vmem:[#allocation12 + $0x20] sm:$0xff]
          %v424 = vld [vmem:[#allocation12 + $0x28] sm:$0xff]
          %v425 = vld [vmem:[#allocation12 + $0x30] sm:$0xff]
          %v426 = vld [vmem:[#allocation12 + $0x38] sm:$0xff]
          %v427 = vld [vmem:[%s5] sm:$0x3]
          %v429 = vperm.slane %v427, 0
          %v430 = vperm.slane %v427, 1
          %vm433 = vcmask 261120
          %v435 = vsel %vm433, %v418, 0
          %437 = vmatpush.msra.mxu0 0.0
          %438 = vmatpush.msra.mxu0 0.0
          %439 = vmatpush.msra.mxu0 0.0
          %440 = vmatpush.msra.mxu0 0.0
          %441 = vmatpush.msra.mxu0 0.0
          %442 = vmatpush.msra.mxu0 0.0
          %443 = vmatpush.msra.mxu0 0.0
          %444 = vmatpush.msra.mxu0 0.0
          %445 = vmatpush.msra.mxu0 0.0
          %446 = vmatpush.msra.mxu0 0.0
          %447 = vmatpush.msra.mxu0 0.0
          %448 = vmatpush.msra.mxu0 0.0
          %449 = vmatpush.msra.mxu0 %v425
          %450 = vmatpush.msra.mxu0 %v423
          %451 = vmatpush.msra.mxu0 %v421
          %452 = vmatpush.msra.mxu0 %v419
          %453 = vmatmul.f32.gmra.mxu0 %v435
          %v454 = vpop.f32.mrf.mxu0
          %v455 = vadd.f32 %v429, %v454
          %456 = vdwg.mxu0
          %457 = vmatpush.msra.mxu0 0.0
          %458 = vmatpush.msra.mxu0 0.0
          %459 = vmatpush.msra.mxu0 0.0
          %460 = vmatpush.msra.mxu0 0.0
          %461 = vmatpush.msra.mxu0 0.0
          %462 = vmatpush.msra.mxu0 0.0
          %463 = vmatpush.msra.mxu0 0.0
          %464 = vmatpush.msra.mxu0 0.0
          %465 = vmatpush.msra.mxu0 0.0
          %466 = vmatpush.msra.mxu0 0.0
          %467 = vmatpush.msra.mxu0 0.0
          %468 = vmatpush.msra.mxu0 0.0
          %469 = vmatpush.msra.mxu0 %v426
          %470 = vmatpush.msra.mxu0 %v424
          %471 = vmatpush.msra.mxu0 %v422
          %472 = vmatpush.msra.mxu0 %v420
          %473 = vmatmul.f32.gmra.mxu0 %v435
          %v474 = vpop.f32.mrf.mxu0
          %v475 = vadd.f32 %v430, %v474
          %476 = vdwg.mxu0
          %v477 = vld [vmem:[#allocation2] sm:$0xff]
          %478 = vmatpush.xpose.msra.mxu0 0.0
          %479 = vmatpush.xpose.msra.mxu0 0.0
          %480 = vmatpush.xpose.msra.mxu0 0.0
          %481 = vmatpush.xpose.msra.mxu0 0.0
          %482 = vmatpush.xpose.msra.mxu0 0.0
          %483 = vmatpush.xpose.msra.mxu0 0.0
          %484 = vmatpush.xpose.msra.mxu0 0.0
          %485 = vmatpush.xpose.msra.mxu0 0.0
          %486 = vmatpush.xpose.msra.mxu0 0.0
          %487 = vmatpush.xpose.msra.mxu0 0.0
          %488 = vmatpush.xpose.msra.mxu0 0.0
          %489 = vmatpush.xpose.msra.mxu0 0.0
          %490 = vmatpush.xpose.msra.mxu0 0.0
          %491 = vmatpush.xpose.msra.mxu0 0.0
          %492 = vmatpush.xpose.msra.mxu0 0.0
          %493 = vmatpush.xpose.msra.mxu0 %v455
          %494 = vmatmul.f32.gmra.mxu0 %v477
          %v495 = vpop.f32.mrf.mxu0
          %v496 = vadd.f32 0.0, %v495
          %497 = vdwg.mxu0
          %v498 = vlaneseq
          %v499 = vshrl.u32 %v498, 7
          %v500 = vstv %s412
          %v501 = vadd.s32 %v500, %v499
          %v502 = vlaneseq
          %v503 = vand.u32 %v502, 127
          %v504 = vstv %s411
          %v505 = vadd.s32 %v504, %v503
          %vm506 = vcmp.le.s32.totalorder %v505, %v501
          %v507 = vsel %vm506, %v496, -inf
          %v508 = vld [vmem:[#allocation3] sm:$0xff]
          %vm509 = vcmask 64512
          %v510 = vsel %vm509, %v507, -inf
          %511 = vmax.xlane.f32.xlu0 %v510
          %v512 = vpop.xlane.xlu0 %511
          %v513 = vmax.f32 %v508, %v512
          %v514 = vsub.f32 %v508, %v513
          %v515 = vmul.f32 %v514, 1.442695
          %v516 = vpow.pop %v515
          %518 = vset.pattern.permute.xlu0 0
          %519 = vperm.xlu0 %518, %v513
          %v520 = vpop.permute.xlu0 %519
          %v522 = vsub.f32 %v507, %v520
          %v523 = vmul.f32 %v522, 1.442695
          %v524 = vpow.pop %v523
          %v525 = vld [vmem:[#allocation4] sm:$0xff]
          %v526 = vmul.f32 %v516, %v525
          %v527 = vsel %vm509, %v524, 0.0
          %528 = vadd.xlane.f32.xlu0 %v527
          %v529 = vpop.xlane.xlu0 %528
          %v530 = vadd.f32 %v526, %v529
          %vm531 = vcmask 7168
          %532 = vst.msk [vmem:[#allocation4] sm:$0xff] %vm531, %v530
          %v533 = vld [vmem:[#allocation5] sm:$0xff]
          %535 = vset.pattern.permute.xlu0 0
          %536 = vperm.xlu0 %535, %v516
          %v537 = vpop.permute.xlu0 %536
          %v539 = vmul.f32 %v537, %v533
          %v541 = vsel %vm509, %v524, 0
          %543 = vmatpush.msra.mxu0 0.0
          %544 = vmatpush.msra.mxu0 0.0
          %545 = vmatpush.msra.mxu0 0.0
          %546 = vmatpush.msra.mxu0 0.0
          %547 = vmatpush.msra.mxu0 0.0
          %548 = vmatpush.msra.mxu0 0.0
          %549 = vmatpush.msra.mxu0 0.0
          %550 = vmatpush.msra.mxu0 0.0
          %551 = vmatpush.msra.mxu0 0.0
          %552 = vmatpush.msra.mxu0 0.0
          %553 = vmatpush.msra.mxu0 0.0
          %554 = vmatpush.msra.mxu0 0.0
          %555 = vmatpush.msra.mxu0 0.0
          %556 = vmatpush.msra.mxu0 0.0
          %557 = vmatpush.msra.mxu0 0.0
          %558 = vmatpush.msra.mxu0 %v475
          %559 = vmatmul.f32.gmra.mxu0 %v541
          %v560 = vpop.f32.mrf.mxu0
          %v561 = vadd.f32 0.0, %v560
          %562 = vdwg.mxu0
          %v563 = vadd.f32 %v539, %v561
          %564 = vst [vmem:[#allocation5] sm:$0xff] %v563
          %565 = vst.msk [vmem:[#allocation3] sm:$0xff] %vm531, %v513
        $region68: #{tpu_custom_call.1} parent=43 // pred_fallthru
          _
        // Predicated region
        $region69: #{tpu_custom_call.1} parent=43 // pred_check
          %p566 = pneg %p368
        $region70: #{tpu_custom_call.1} parent=43 // pred_check_branch
          %568 = sbr.rel (%p566) target = $region72
        $region71: #{tpu_custom_call.1} parent=43 // pred_region
          %v569 = vld [vmem:[#allocation4] sm:$0xff]
          %v570 = vrcp.pop %v569
          %v571 = vmul.f32 %v569, %v570
          %v572 = vsub.f32 2.0, %v571
          %v573 = vmul.f32 %v570, %v572
          %v574 = vld [vmem:[#allocation5] sm:$0xff]
          %576 = vset.pattern.permute.xlu0 0
          %577 = vperm.xlu0 %576, %v573
          %v578 = vpop.permute.xlu0 %577
          %v580 = vmul.f32 %v574, %v578
          %581 = vst [vmem:[%s367] sm:$0xff] %v580
        $region72: #{tpu_custom_call.1} parent=43 // pred_fallthru
          _
        %s582 = sand.u32 %s196, 1
        %s583 = scalar_lea.sflag [#allocation8], %s582
        %s584 = sand.u32 %s196, 1
        %s585 = smul.addr %s584, 8
        %s586 = scalar_lea.vmem [#allocation14], %s585
        // Predicated region
        $region73: #{tpu_custom_call.1} parent=43 // pred_check
          %p587 = pneg %p206
        $region74: #{tpu_custom_call.1} parent=43 // pred_check_branch
          %589 = sbr.rel (%p587) target = $region76
        $region75: #{tpu_custom_call.1} parent=43 // pred_region
          %591 = vsyncadd %s583, 0
          %s592 = sadd.s32 %s33, %s32
          %s593 = smul.addr %s592, 8
          %s594 = scalar_lea.hbm %s6, %s593
          %s596 = sshll.u32 %s586, 4
          %s597 = int_to_ptr.vmem [resolvable:$true] %s596
          %s598 = sshll.u32 %s594, 4
          %s599 = int_to_ptr.hbm [resolvable:$true] %s598
          %601 = dma.vmem_to_hbm [thread:$0]  %s597, 128, %s599, %s583
        $region76: #{tpu_custom_call.1} parent=43 // pred_fallthru
          _
      $region44: #{tpu_custom_call.1} parent=5 // pred_fallthru
        _
      %p602 = scmp.le.s32.totalorder 2, %s22
      // Predicated region
      $region77: #{tpu_custom_call.1} parent=5 // pred_check
        %p603 = pneg %p602
      $region78: #{tpu_custom_call.1} parent=5 // pred_check_branch
        %605 = sbr.rel (%p603) target = $region80
      $region79: #{tpu_custom_call.1} parent=5 // pred_region
        %s606 = ssub.s32 %s22, 2
        // Predicated region
        $region81: #{tpu_custom_call.1} parent=79 // pred_check
          %p607 = pneg %p212
        $region82: #{tpu_custom_call.1} parent=79 // pred_check_branch
          %609 = sbr.rel (%p607) target = $region84
        $region83: #{tpu_custom_call.1} parent=79 // pred_region
          %s610 = sand.u32 %s197, 1
          %s611 = scalar_lea.sflag [#allocation8], %s610
          %s612 = sand.u32 %s197, 1
          %s613 = smul.addr %s612, 8
          %s614 = scalar_lea.vmem [#allocation14], %s613
          %616 = dma.done %s611, 128
        $region84: #{tpu_custom_call.1} parent=79 // pred_fallthru
          _
      $region80: #{tpu_custom_call.1} parent=5 // pred_fallthru
        _
    $region6: #{tpu_custom_call.1} parent=1 // loop_footer
      %s26 = sadd.s32 1, %s22
    $region7: #{tpu_custom_call.1} parent=1 // loop_footer_branch
      %21 = sbr.rel target = $region3
    $region8: #{tpu_custom_call.1} parent=1 // loop_exit
      _
    %617 = vsyncpa [#allocation7], 1
    %s618 = scalar_lea.sflag [#allocation7], 1
    %619 = vsyncpa %s618, 1
    %620 = vsyncpa [#allocation10], 1
    %s621 = scalar_lea.sflag [#allocation10], 1
    %622 = vsyncpa %s621, 1
    %623 = vsyncpa [#allocation13], 1
    %624 = vsyncpa [#allocation8], 1
    %s625 = scalar_lea.sflag [#allocation8], 1
    %626 = vsyncpa %s625, 1

</llo_original>
